<compile_context>
chip_gen: v5e
topology: v5e:2x2
jax: 0.10.0
libtpu: 0.0.40
codegen_flags: <defaults>
</compile_context>

<pallas_src>
import functools
import math

import jax
import jax.numpy as jnp
from jax import lax
from jax.experimental import pallas as pl
from jax.experimental.pallas import tpu as pltpu


def _round_up(x: int, m: int) -> int:
    return ((x + m - 1) // m) * m


@functools.lru_cache(maxsize=1)
def _vmem_limit_and_budget():
    """Returns (vmem_limit_bytes for CompilerParams, planning budget in bytes)."""
    try:
        cap = int(pltpu.get_tpu_info().vmem_capacity_bytes)
    except Exception:
        cap = 64 * 1024 * 1024                      # conservative (v7x per-TC)
    limit = min(cap * 3 // 4, 100 * 1024 * 1024)    # ~96 MiB on v5e/v6e, 48 MiB on v7x
    budget = int(limit * 0.85)                      # headroom for Mosaic scratch
    return limit, budget


def _gelu(x, approximate):
    if approximate:
        # tanh approximation -> routes through the otherwise-idle EUP slot.
        return jax.nn.gelu(x, approximate=True)
    # PyTorch nn.GELU default is the exact (erf-based) GELU.
    return 0.5 * x * (1.0 + lax.erf(x * (1.0 / math.sqrt(2.0))))


def _chunk_update(x, w1c, b1c, w2c, acc_ref, approximate):
    """acc += GELU(x @ w1c + b1c) @ w2c for one mlp_dim chunk (f32 accumulation)."""
    h = jnp.dot(x, w1c, preferred_element_type=jnp.float32)
    h = _gelu(h + b1c.astype(jnp.float32), approximate)
    acc_ref[...] += jnp.dot(h.astype(w2c.dtype), w2c,
                            preferred_element_type=jnp.float32)
    # TODO(synk): dropout_rate == 0.0 -> drop1/drop2 are identity; stochastic
    # dropout would need pltpu.prng_seed / prng_random_bits and is not needed here.


# ---------------------------------------------------------------------------
# Path A: weights fully resident in VMEM (fetched once); 1-D grid over tokens.
# ---------------------------------------------------------------------------
def _mlp_resident_kernel(x_ref, w1_ref, b1_ref, w2_ref, b2_ref, o_ref, acc_ref,
                         *, tn, n_chunks, approximate):
    x = x_ref[...]
    acc_ref[...] = jnp.zeros_like(acc_ref)

    if n_chunks <= 16:
        for t in range(n_chunks):                       # static unroll
            s = t * tn
            _chunk_update(x, w1_ref[:, s:s + tn], b1_ref[:, s:s + tn],
                          w2_ref[s:s + tn, :], acc_ref, approximate)
    else:
        def body(t, carry):
            s = pl.multiple_of(t * tn, tn)
            _chunk_update(x, w1_ref[:, pl.ds(s, tn)], b1_ref[:, pl.ds(s, tn)],
                          w2_ref[pl.ds(s, tn), :], acc_ref, approximate)
            return carry
        lax.fori_loop(0, n_chunks, body, 0)

    o_ref[...] = (acc_ref[...] + b2_ref[...].astype(jnp.float32)).astype(o_ref.dtype)


# ---------------------------------------------------------------------------
# Path B: weights streamed from HBM; 2-D grid (token tiles x mlp_dim chunks).
# ---------------------------------------------------------------------------
def _mlp_chunked_kernel(x_ref, w1_ref, b1_ref, w2_ref, b2_ref, o_ref, acc_ref,
                        *, approximate):
    k = pl.program_id(1)

    @pl.when(k == 0)
    def _():
        acc_ref[...] = jnp.zeros_like(acc_ref)

    _chunk_update(x_ref[...], w1_ref[...], b1_ref[...], w2_ref[...],
                  acc_ref, approximate)

    @pl.when(k == pl.num_programs(1) - 1)
    def _():
        o_ref[...] = (acc_ref[...] + b2_ref[...].astype(jnp.float32)
                      ).astype(o_ref.dtype)


@functools.partial(jax.jit, static_argnames=("tm", "tn", "compute_dtype",
                                             "approximate_gelu", "force_path"))
def mlp_block(x, w1, b1, w2, b2, *, tm=None, tn=1024, compute_dtype=None,
              approximate_gelu=False, force_path="auto"):
    """ViT MLPBlock forward: GELU(x @ w1 + b1) @ w2 + b2 (dropout_rate = 0).

    x: (..., hidden).  w1: (hidden, mlp_dim), w2: (mlp_dim, hidden) — i.e. the
    transposes of the PyTorch nn.Linear weight layout.
    compute_dtype: dtype fed to the MXU.  Pass jnp.bfloat16 for 2-3x matmul
      throughput and half the weight HBM traffic (accumulation stays f32);
      default None preserves the input dtype (exact parity with the module).
    """
    orig_shape = x.shape
    out_dtype = x.dtype
    hidden = orig_shape[-1]
    mlp_dim = w1.shape[1]
    assert w1.shape == (hidden, mlp_dim) and w2.shape == (mlp_dim, hidden)

    cdt = jnp.dtype(x.dtype) if compute_dtype is None else jnp.dtype(compute_dtype)
    csz = cdt.itemsize
    osz = jnp.dtype(out_dtype).itemsize
    bsz = jnp.dtype(b1.dtype).itemsize

    x2d = x.reshape(-1, hidden).astype(cdt)
    w1c = w1.astype(cdt)
    w2c = w2.astype(cdt)
    b1r = b1.reshape(1, mlp_dim)
    b2r = b2.reshape(1, hidden)
    n_tok = x2d.shape[0]

    tn = max(128, (int(tn) // 128) * 128)
    vmem_limit, budget = _vmem_limit_and_budget()

    # Token-tile candidates: multiples of 8, never larger than the token count,
    # so only the trailing block may be partial (Pallas masks its OOB rows).
    tm_cap = n_tok if n_tok < 8 else (n_tok // 8) * 8
    cands = [1024, 768, 512, 384, 256, 128, 64, 32, 16, 8, tm_cap]
    if tm is not None:
        assert tm % 8 == 0, "tm must be a multiple of 8"
        cands = [tm] + cands
    tm_cands = sorted({min(c, tm_cap) for c in cands if c > 0}, reverse=True)

    # mlp_dim chunk for the in-kernel loop of the resident path.
    def pick_inner_chunk():
        if mlp_dim <= tn:
            return mlp_dim
        c = (tn // 128) * 128
        while c >= 128:
            if mlp_dim % c == 0:
                return c
            c -= 128
        return mlp_dim
    tn_res = pick_inner_chunk()

    # mlp_dim chunk for the HBM-streamed path (mlp_dim zero-padded to a multiple).
    tn_hbm = min(tn, _round_up(mlp_dim, 128))
    mlp_pad = _round_up(mlp_dim, tn_hbm)

    def fits_resident(tm_):
        weights = 2 * 2 * hidden * mlp_dim * csz     # W1 + W2, double-buffered
        biases = 2 * (mlp_dim + hidden) * bsz
        tiles = 2 * tm_ * hidden * (csz + osz)       # x + out tiles, double-buffered
        acc = tm_ * hidden * 4
        work = 3 * tm_ * tn_res * 4                  # GELU intermediate + temporaries
        return weights + biases + tiles + acc + work <= budget

    def fits_chunked(tm_):
        weights = 2 * 2 * hidden * tn_hbm * csz      # W1/W2 chunks, double-buffered
        biases = 2 * (tn_hbm + hidden) * bsz
        tiles = 2 * tm_ * hidden * (csz + osz)
        acc = tm_ * hidden * 4
        work = 3 * tm_ * tn_hbm * 4
        return weights + biases + tiles + acc + work <= budget

    if force_path == "resident":
        resident = True
    elif force_path == "chunked":
        resident = False
    else:
        resident = fits_resident(min(256, tm_cands[0]))

    if resident:
        tm_eff = next((c for c in tm_cands if fits_resident(c)), tm_cands[-1])
        n_chunks = mlp_dim // tn_res
        grid = (pl.cdiv(n_tok, tm_eff),)
        kernel = functools.partial(_mlp_resident_kernel, tn=tn_res,
                                   n_chunks=n_chunks, approximate=approximate_gelu)
        in_specs = [
            pl.BlockSpec((tm_eff, hidden), lambda i: (i, 0)),    # x tile
            pl.BlockSpec((hidden, mlp_dim), lambda i: (0, 0)),   # W1 (resident)
            pl.BlockSpec((1, mlp_dim), lambda i: (0, 0)),        # b1 (resident)
            pl.BlockSpec((mlp_dim, hidden), lambda i: (0, 0)),   # W2 (resident)
            pl.BlockSpec((1, hidden), lambda i: (0, 0)),         # b2 (resident)
        ]
        out_specs = pl.BlockSpec((tm_eff, hidden), lambda i: (i, 0))
        dim_sem = ("parallel",)
        # Weights are read from HBM exactly once.
        weight_bytes = 2 * hidden * mlp_dim * csz + (mlp_dim + hidden) * bsz
        # TODO(synk): pl.Buffered(1) on the weight specs would halve their VMEM
        # footprint (they are only fetched once anyway); omitted for portability.
        args = (x2d, w1c, b1r, w2c, b2r)
    else:
        if mlp_pad != mlp_dim:
            # Zero-padding is exact: GELU(0) = 0 and zero W2 rows contribute 0.
            w1c = jnp.pad(w1c, ((0, 0), (0, mlp_pad - mlp_dim)))
            b1r = jnp.pad(b1r, ((0, 0), (0, mlp_pad - mlp_dim)))
            w2c = jnp.pad(w2c, ((0, mlp_pad - mlp_dim), (0, 0)))
        tm_eff = next((c for c in tm_cands if fits_chunked(c)), tm_cands[-1])
        grid = (pl.cdiv(n_tok, tm_eff), mlp_pad // tn_hbm)
        kernel = functools.partial(_mlp_chunked_kernel, approximate=approximate_gelu)
        in_specs = [
            pl.BlockSpec((tm_eff, hidden), lambda i, k: (i, 0)),   # x tile
            pl.BlockSpec((hidden, tn_hbm), lambda i, k: (0, k)),   # W1 chunk
            pl.BlockSpec((1, tn_hbm), lambda i, k: (0, k)),        # b1 chunk
            pl.BlockSpec((tn_hbm, hidden), lambda i, k: (k, 0)),   # W2 chunk
            pl.BlockSpec((1, hidden), lambda i, k: (0, 0)),        # b2 (full)
        ]
        out_specs = pl.BlockSpec((tm_eff, hidden), lambda i, k: (i, 0))
        dim_sem = ("parallel", "arbitrary")
        # Weights are re-streamed once per token tile.
        weight_bytes = (grid[0] * (2 * hidden * mlp_pad * csz + mlp_pad * bsz)
                        + hidden * bsz)
        args = (x2d, w1c, b1r, w2c, b2r)

    cost = pl.CostEstimate(
        flops=4 * n_tok * hidden * mlp_dim,
        transcendentals=n_tok * mlp_dim,
        bytes_accessed=int(n_tok * hidden * (csz + osz) + weight_bytes),
    )

    out = pl.pallas_call(
        kernel,
        out_shape=jax.ShapeDtypeStruct((n_tok, hidden), out_dtype),
        grid_spec=pltpu.PrefetchScalarGridSpec(
            num_scalar_prefetch=0,
            grid=grid,
            in_specs=in_specs,
            out_specs=out_specs,
            scratch_shapes=[pltpu.VMEM((tm_eff, hidden), jnp.float32)],
        ),
        compiler_params=pltpu.CompilerParams(
            dimension_semantics=dim_sem,
            vmem_limit_bytes=vmem_limit,
        ),
        cost_estimate=cost,
    )(*args)

    return out.reshape(orig_shape)


def init_params(key, hidden_size, mlp_dim, dtype=jnp.float32):
    """Deterministic synthetic parameters (shapes match nn.Linear, stored (in, out))."""
    k1, k2, k3, k4 = jax.random.split(key, 4)
    s1 = 1.0 / math.sqrt(hidden_size)
    s2 = 1.0 / math.sqrt(mlp_dim)
    w1 = jax.random.uniform(k1, (hidden_size, mlp_dim), dtype, -s1, s1)
    b1 = jax.random.uniform(k2, (mlp_dim,), dtype, -s1, s1)
    w2 = jax.random.uniform(k3, (mlp_dim, hidden_size), dtype, -s2, s2)
    b2 = jax.random.uniform(k4, (hidden_size,), dtype, -s2, s2)
    return w1, b1, w2, b2


def _reference(x, w1, b1, w2, b2):
    return jax.nn.gelu(x @ w1 + b1, approximate=False) @ w2 + b2


if __name__ == "__main__":
    key = jax.random.PRNGKey(0)
    kx, kp, kx2 = jax.random.split(key, 3)

    batch, seq, hidden_size, mlp_dim = 2, 8, 32, 64
    x = jax.random.normal(kx, (batch, seq, hidden_size), jnp.float32)
    w1, b1, w2, b2 = init_params(kp, hidden_size, mlp_dim)
    ref = _reference(x, w1, b1, w2, b2)

    # 1) Auto path (weights-resident), f32 compute: exact parity with the module.
    y = mlp_block(x, w1, b1, w2, b2)
    jax.block_until_ready(y)
    assert y.shape == x.shape and y.dtype == x.dtype
    assert jnp.allclose(y, ref, atol=2e-5, rtol=2e-5), "mismatch (resident, f32)"

    # 2) Token count not a multiple of the tile (exercises the masked last block).
    x2 = jax.random.normal(kx2, (2, 13, hidden_size), jnp.float32)
    y2 = mlp_block(x2, w1, b1, w2, b2)
    jax.block_until_ready(y2)
    assert y2.shape == x2.shape
    assert jnp.allclose(y2, _reference(x2, w1, b1, w2, b2),
                        atol=2e-5, rtol=2e-5), "mismatch (ragged tokens)"

    # 3) HBM-streamed (chunked reduction) fallback path, incl. mlp_dim zero-pad.
    y3 = mlp_block(x, w1, b1, w2, b2, force_path="chunked")
    jax.block_until_ready(y3)
    assert jnp.allclose(y3, ref, atol=2e-5, rtol=2e-5), "mismatch (chunked)"

    # 4) bf16 compute path (production config on v6e/v7x); loose tolerance.
    y4 = mlp_block(x, w1, b1, w2, b2, compute_dtype=jnp.bfloat16)
    jax.block_until_ready(y4)
    assert jnp.allclose(y4, ref, atol=5e-2, rtol=5e-2), "mismatch (bf16 compute)"

    print("KERNEL_OK")
</pallas_src>

<mosaic_0001>
module attributes {stable_mosaic.version = 11 : i64} {
  func.func @_mlp_resident_kernel(%arg0: i32, %arg1: memref<16x32xf32, #tpu.memory_space<vmem>>, %arg2: memref<32x64xf32, #tpu.memory_space<vmem>>, %arg3: memref<1x64xf32, #tpu.memory_space<vmem>>, %arg4: memref<64x32xf32, #tpu.memory_space<vmem>>, %arg5: memref<1x32xf32, #tpu.memory_space<vmem>>, %arg6: memref<16x32xf32, #tpu.memory_space<vmem>>, %arg7: memref<16x32xf32, #tpu.memory_space<vmem>>) attributes {dimension_semantics = [#tpu.dimension_semantics<parallel>], iteration_bounds = array<i64: 1>, scalar_prefetch = 0 : i64, scratch_operands = 1 : i64, tpu.core_type = #tpu.core_type<tc>, window_params = [{transform_indices = @transform_0, window_bounds = array<i64: 16, 32>}, {pipeline_mode = #tpu.pipeline_mode<synchronous>, transform_indices = @transform_1, window_bounds = array<i64: 32, 64>}, {pipeline_mode = #tpu.pipeline_mode<synchronous>, transform_indices = @transform_2, window_bounds = array<i64: 1, 64>}, {pipeline_mode = #tpu.pipeline_mode<synchronous>, transform_indices = @transform_3, window_bounds = array<i64: 64, 32>}, {pipeline_mode = #tpu.pipeline_mode<synchronous>, transform_indices = @transform_4, window_bounds = array<i64: 1, 32>}, {transform_indices = @transform_5, window_bounds = array<i64: 16, 32>}]} {
    %c0 = arith.constant 0 : index
    %c0_0 = arith.constant 0 : index
    %0 = vector.load %arg1[%c0, %c0_0] : memref<16x32xf32, #tpu.memory_space<vmem>>, vector<16x32xf32>
    %cst = arith.constant 0.000000e+00 : f32
    %1 = vector.broadcast %cst : f32 to vector<16x32xf32>
    %c0_1 = arith.constant 0 : index
    %c0_2 = arith.constant 0 : index
    %2 = vector.load %arg7[%c0_1, %c0_2] : memref<16x32xf32, #tpu.memory_space<vmem>>, vector<16x32xf32>
    tpu.vector_store %arg7[%c0_1, %c0_2], %1 {strides = array<i32>} : memref<16x32xf32, #tpu.memory_space<vmem>>, vector<16x32xf32>,
    %c0_3 = arith.constant 0 : index
    %c0_4 = arith.constant 0 : index
    %3 = vector.load %arg2[%c0_3, %c0_4] : memref<32x64xf32, #tpu.memory_space<vmem>>, vector<32x64xf32>
    %c0_5 = arith.constant 0 : index
    %c0_6 = arith.constant 0 : index
    %4 = vector.load %arg3[%c0_5, %c0_6] : memref<1x64xf32, #tpu.memory_space<vmem>>, vector<1x64xf32>
    %c0_7 = arith.constant 0 : index
    %c0_8 = arith.constant 0 : index
    %5 = vector.load %arg4[%c0_7, %c0_8] : memref<64x32xf32, #tpu.memory_space<vmem>>, vector<64x32xf32>
    %cst_9 = arith.constant dense<0.000000e+00> : vector<16x64xf32>
    %6 = tpu.matmul %0, %3, %cst_9 {dimension_numbers = #tpu.dot_dimension_numbers<[1], [0], [0], [1], [0, 0, 1, 1], [], []>} : vector<16x32xf32>, vector<32x64xf32>, vector<16x64xf32> -> vector<16x64xf32>
    %7 = vector.broadcast %4 : vector<1x64xf32> to vector<16x64xf32>
    %8 = arith.addf %6, %7 : vector<16x64xf32>
    %cst_10 = arith.constant 5.000000e-01 : f32
    %9 = vector.broadcast %cst_10 : f32 to vector<16x64xf32>
    %10 = arith.mulf %9, %8 : vector<16x64xf32>
    %cst_11 = arith.constant 0.707106769 : f32
    %11 = vector.broadcast %cst_11 : f32 to vector<16x64xf32>
    %12 = arith.mulf %8, %11 : vector<16x64xf32>
    %13 = math.erf %12 : vector<16x64xf32>
    %cst_12 = arith.constant 1.000000e+00 : f32
    %14 = vector.broadcast %cst_12 : f32 to vector<16x64xf32>
    %15 = arith.addf %14, %13 : vector<16x64xf32>
    %16 = arith.mulf %10, %15 : vector<16x64xf32>
    %c0_13 = arith.constant 0 : index
    %c0_14 = arith.constant 0 : index
    %17 = vector.load %arg7[%c0_13, %c0_14] : memref<16x32xf32, #tpu.memory_space<vmem>>, vector<16x32xf32>
    %cst_15 = arith.constant dense<0.000000e+00> : vector<16x32xf32>
    %18 = tpu.matmul %16, %5, %cst_15 {dimension_numbers = #tpu.dot_dimension_numbers<[1], [0], [0], [1], [0, 0, 1, 1], [], []>} : vector<16x64xf32>, vector<64x32xf32>, vector<16x32xf32> -> vector<16x32xf32>
    %19 = arith.addf %17, %18 : vector<16x32xf32>
    %c0_16 = arith.constant 0 : index
    %c0_17 = arith.constant 0 : index
    %20 = vector.load %arg7[%c0_16, %c0_17] : memref<16x32xf32, #tpu.memory_space<vmem>>, vector<16x32xf32>
    tpu.vector_store %arg7[%c0_16, %c0_17], %19 {strides = array<i32>} : memref<16x32xf32, #tpu.memory_space<vmem>>, vector<16x32xf32>,
    %c0_18 = arith.constant 0 : index
    %c0_19 = arith.constant 0 : index
    %21 = vector.load %arg7[%c0_18, %c0_19] : memref<16x32xf32, #tpu.memory_space<vmem>>, vector<16x32xf32>
    %c0_20 = arith.constant 0 : index
    %c0_21 = arith.constant 0 : index
    %22 = vector.load %arg5[%c0_20, %c0_21] : memref<1x32xf32, #tpu.memory_space<vmem>>, vector<1x32xf32>
    %23 = vector.broadcast %22 : vector<1x32xf32> to vector<16x32xf32>
    %24 = arith.addf %21, %23 : vector<16x32xf32>
    %c0_22 = arith.constant 0 : index
    %c0_23 = arith.constant 0 : index
    %25 = vector.load %arg6[%c0_22, %c0_23] : memref<16x32xf32, #tpu.memory_space<vmem>>, vector<16x32xf32>
    tpu.vector_store %arg6[%c0_22, %c0_23], %24 {strides = array<i32>} : memref<16x32xf32, #tpu.memory_space<vmem>>, vector<16x32xf32>,
    return
  }
  func.func @transform_0(%arg0: i32) -> (i32, i32) {
    %c0_i32 = arith.constant 0 : i32
    %c0_i32_0 = arith.constant 0 : i32
    return %arg0, %c0_i32 : i32, i32
  }
  func.func @transform_1(%arg0: i32) -> (i32, i32) {
    %c0_i32 = arith.constant 0 : i32
    %c0_i32_0 = arith.constant 0 : i32
    %c0_i32_1 = arith.constant 0 : i32
    return %c0_i32, %c0_i32_0 : i32, i32
  }
  func.func @transform_2(%arg0: i32) -> (i32, i32) {
    %c0_i32 = arith.constant 0 : i32
    %c0_i32_0 = arith.constant 0 : i32
    %c0_i32_1 = arith.constant 0 : i32
    return %c0_i32, %c0_i32_0 : i32, i32
  }
  func.func @transform_3(%arg0: i32) -> (i32, i32) {
    %c0_i32 = arith.constant 0 : i32
    %c0_i32_0 = arith.constant 0 : i32
    %c0_i32_1 = arith.constant 0 : i32
    return %c0_i32, %c0_i32_0 : i32, i32
  }
  func.func @transform_4(%arg0: i32) -> (i32, i32) {
    %c0_i32 = arith.constant 0 : i32
    %c0_i32_0 = arith.constant 0 : i32
    %c0_i32_1 = arith.constant 0 : i32
    return %c0_i32, %c0_i32_0 : i32, i32
  }
  func.func @transform_5(%arg0: i32) -> (i32, i32) {
    %c0_i32 = arith.constant 0 : i32
    %c0_i32_0 = arith.constant 0 : i32
    return %arg0, %c0_i32 : i32, i32
  }
}

</mosaic_0001>

<llo_original>
// kernel: mlp_block.1
$region0: #{mlp_block.1}
  #allocation0 [shape = 'u32[]', space=smem, size = 0x4, offset = 0x4, fixed_abs, tag = 'smem constant byte address 0x4 - core index']
  #allocation1 [shape = 'u32[72,128]{1,0:T(1,128)}', space=vmem, size = 0x9000, scoped, tag = 'internal scratch']
  #allocation2 [shape = 'f32[16,32]{1,0:T(8,128)}', space=vmem, size = 0x2000, scoped, tag = 'scratch operand']
  %s0 = inlined_call_operand.vmem [shape: f32[16,32], index: 0, kind: input, shape index: {}]
  %s1 = inlined_call_operand.vmem [shape: f32[32,64], index: 1, kind: input, shape index: {}]
  %s2 = inlined_call_operand.vmem [shape: f32[1,64], index: 2, kind: input, shape index: {}]
  %s3 = inlined_call_operand.vmem [shape: f32[64,32], index: 3, kind: input, shape index: {}]
  %s4 = inlined_call_operand.vmem [shape: f32[1,32], index: 4, kind: input, shape index: {}]
  %s5 = inlined_call_operand.hbm [shape: f32[16,32], index: 5, kind: output, shape index: {}]
  %s6 = sld [smem:[#allocation0]]
  $region30: #{mlp_block.1} parent=0
    _
  %s8 = ssub.s32 1, %s6
  %s9 = scalar_select 0, %s8, %s6
  $region1: #{mlp_block.1} parent=0
    #allocation3 [shape = 'u8[8192]{0}', space=vmem, size = 0x2000, scoped, tag = 'output window, operand 0, single buffered']
    #allocation4 [shape = 's32[1]{0}', space=sflag, size = 0x4, scoped, tag = 'scoped memory for mlp_block.1']
    %10 = vsyncpa [#allocation4], 0
    // Predicated region
    $region2: #{mlp_block.1} parent=1 // pred_check
      _
    $region3: #{mlp_block.1} parent=1 // pred_check_branch
      %12 = sbr.rel (0) target = $region5
    $region4: #{mlp_block.1} parent=1 // pred_region
      _
    $region5: #{mlp_block.1} parent=1 // pred_fallthru
      _
    // Predicated region
    $region6: #{mlp_block.1} parent=1 // pred_check
      _
    $region7: #{mlp_block.1} parent=1 // pred_check_branch
      %14 = sbr.rel (0) target = $region9
    $region8: #{mlp_block.1} parent=1 // pred_region
      _
    $region9: #{mlp_block.1} parent=1 // pred_fallthru
      _
    // Predicated region
    $region10: #{mlp_block.1} parent=1 // pred_check
      _
    $region11: #{mlp_block.1} parent=1 // pred_check_branch
      %16 = sbr.rel (0) target = $region13
    $region12: #{mlp_block.1} parent=1 // pred_region
      _
    $region13: #{mlp_block.1} parent=1 // pred_fallthru
      _
    // Predicated region
    $region14: #{mlp_block.1} parent=1 // pred_check
      _
    $region15: #{mlp_block.1} parent=1 // pred_check_branch
      %18 = sbr.rel (0) target = $region17
    $region16: #{mlp_block.1} parent=1 // pred_region
      _
    $region17: #{mlp_block.1} parent=1 // pred_fallthru
      _
    // Predicated region
    $region18: #{mlp_block.1} parent=1 // pred_check
      _
    $region19: #{mlp_block.1} parent=1 // pred_check_branch
      %20 = sbr.rel (0) target = $region21
    $region20: #{mlp_block.1} parent=1 // pred_region
      _
    $region21: #{mlp_block.1} parent=1 // pred_fallthru
      _
    %v21 = vld [vmem:[%s0] sm:$0xff]
    %v22 = vld [vmem:[%s0 + $0x8] sm:$0xff]
    %vm23 = vcmask 261120
    %24 = vst.msk [vmem:[#allocation2] sm:$0xff] %vm23, 0.0
    %25 = vst.msk [vmem:[#allocation2 + $0x8] sm:$0xff] %vm23, 0.0
    %v26 = vld [vmem:[%s1] sm:$0xff]
    %v27 = vld [vmem:[%s1 + $0x8] sm:$0xff]
    %v28 = vld [vmem:[%s1 + $0x10] sm:$0xff]
    %v29 = vld [vmem:[%s1 + $0x18] sm:$0xff]
    %v30 = vld [vmem:[%s2] sm:$0x1]
    %v31 = vld [vmem:[%s3] sm:$0xff]
    %v32 = vld [vmem:[%s3 + $0x8] sm:$0xff]
    %v33 = vld [vmem:[%s3 + $0x10] sm:$0xff]
    %v34 = vld [vmem:[%s3 + $0x18] sm:$0xff]
    %v35 = vld [vmem:[%s3 + $0x20] sm:$0xff]
    %v36 = vld [vmem:[%s3 + $0x28] sm:$0xff]
    %v37 = vld [vmem:[%s3 + $0x30] sm:$0xff]
    %v38 = vld [vmem:[%s3 + $0x38] sm:$0xff]
    %v40 = vperm.slane %v30, 0
    %v43 = vsel %vm23, %v21, 0
    %v46 = vsel %vm23, %v22, 0
    %48 = vmatpush.msra.mxu0 0.0
    %49 = vmatpush.msra.mxu0 0.0
    %50 = vmatpush.msra.mxu0 0.0
    %51 = vmatpush.msra.mxu0 0.0
    %52 = vmatpush.msra.mxu0 0.0
    %53 = vmatpush.msra.mxu0 0.0
    %54 = vmatpush.msra.mxu0 0.0
    %55 = vmatpush.msra.mxu0 0.0
    %56 = vmatpush.msra.mxu0 0.0
    %57 = vmatpush.msra.mxu0 0.0
    %58 = vmatpush.msra.mxu0 0.0
    %59 = vmatpush.msra.mxu0 0.0
    %60 = vmatpush.msra.mxu0 %v29
    %61 = vmatpush.msra.mxu0 %v28
    %62 = vmatpush.msra.mxu0 %v27
    %63 = vmatpush.msra.mxu0 %v26
    %64 = vmatmul.f32.gmra.mxu0 %v43
    %v65 = vpop.f32.mrf.mxu0
    %v66 = vadd.f32 %v40, %v65
    %67 = vmatmul.f32.gmra.mxu0 %v46
    %v68 = vpop.f32.mrf.mxu0
    %v69 = vadd.f32 %v40, %v68
    %70 = vdwg.mxu0
    %v71 = vmul.f32 %v66, 0.5
    %v72 = vmul.f32 %v69, 0.5
    %v73 = vmul.f32 %v66, 0.70710677
    %v74 = vmul.f32 %v69, 0.70710677
    %v75 = vmul.f32 %v73, %v73
    %v76 = vmin.f32 16.0, %v75
    %v77 = vmul.f32 %v76, 2.1237322e-06
    %v78 = vadd.f32 %v77, 0.00028619796
    %v79 = vmul.f32 %v76, %v78
    %v80 = vadd.f32 %v79, 0.0036580483
    %v81 = vmul.f32 %v76, %v80
    %v82 = vadd.f32 %v81, 0.05243302
    %v83 = vmul.f32 %v76, %v82
    %v84 = vadd.f32 %v83, 0.18741608
    %v85 = vmul.f32 %v76, %v84
    %v86 = vadd.f32 %v85, 1.1283791
    %v87 = vmul.f32 %v73, %v86
    %v88 = vmul.f32 %v76, 3.8918573e-05
    %v89 = vadd.f32 %v88, 0.001143296
    %v90 = vmul.f32 %v76, %v89
    %v91 = vadd.f32 %v90, 0.014752088
    %v92 = vmul.f32 %v76, %v91
    %v93 = vadd.f32 %v92, 0.112945676
    %v94 = vmul.f32 %v76, %v93
    %v95 = vadd.f32 %v94, 0.4994258
    %v96 = vmul.f32 %v76, %v95
    %v97 = vadd.f32 %v96, 1.0
    %v98 = vrcp.pop %v97
    %v99 = vmul.f32 %v97, %v98
    %v100 = vsub.f32 1.0, %v99
    %v101 = vmul.f32 %v98, %v100
    %v102 = vadd.f32 %v98, %v101
    %vm103 = vweird.f32 %v97
    %vm104 = vweird.f32 %v98
    %vm105 = vmor %vm103, %vm104
    %v106 = vsel %vm105, %v98, %v102
    %v107 = vand.u32 2147483647, %v97
    %vm108 = vcmp.eq.f32.partialorder %v107, 8.507059e+37
    %v109 = vand.u32 %v97, 2147483648
    %v110 = vor.u32 1.1754944e-38, %v109
    %v111 = vsel %vm108, %v110, %v106
    %v112 = vmul.f32 %v87, %v111
    %v113 = vmin.f32 %v112, 1.0
    %v114 = vmax.f32 %v113, -1.0
    %v115 = vmul.f32 %v74, %v74
    %v116 = vmin.f32 16.0, %v115
    %v117 = vmul.f32 %v116, 2.1237322e-06
    %v118 = vadd.f32 %v117, 0.00028619796
    %v119 = vmul.f32 %v116, %v118
    %v120 = vadd.f32 %v119, 0.0036580483
    %v121 = vmul.f32 %v116, %v120
    %v122 = vadd.f32 %v121, 0.05243302
    %v123 = vmul.f32 %v116, %v122
    %v124 = vadd.f32 %v123, 0.18741608
    %v125 = vmul.f32 %v116, %v124
    %v126 = vadd.f32 %v125, 1.1283791
    %v127 = vmul.f32 %v74, %v126
    %v128 = vmul.f32 %v116, 3.8918573e-05
    %v129 = vadd.f32 %v128, 0.001143296
    %v130 = vmul.f32 %v116, %v129
    %v131 = vadd.f32 %v130, 0.014752088
    %v132 = vmul.f32 %v116, %v131
    %v133 = vadd.f32 %v132, 0.112945676
    %v134 = vmul.f32 %v116, %v133
    %v135 = vadd.f32 %v134, 0.4994258
    %v136 = vmul.f32 %v116, %v135
    %v137 = vadd.f32 %v136, 1.0
    %v138 = vrcp.pop %v137
    %v139 = vmul.f32 %v137, %v138
    %v140 = vsub.f32 1.0, %v139
    %v141 = vmul.f32 %v138, %v140
    %v142 = vadd.f32 %v138, %v141
    %vm143 = vweird.f32 %v137
    %vm144 = vweird.f32 %v138
    %vm145 = vmor %vm143, %vm144
    %v146 = vsel %vm145, %v138, %v142
    %v147 = vand.u32 2147483647, %v137
    %vm148 = vcmp.eq.f32.partialorder %v147, 8.507059e+37
    %v149 = vand.u32 %v137, 2147483648
    %v150 = vor.u32 1.1754944e-38, %v149
    %v151 = vsel %vm148, %v150, %v146
    %v152 = vmul.f32 %v127, %v151
    %v153 = vmin.f32 %v152, 1.0
    %v154 = vmax.f32 %v153, -1.0
    %v155 = vadd.f32 %v114, 1.0
    %v156 = vadd.f32 %v154, 1.0
    %v157 = vmul.f32 %v71, %v155
    %v158 = vmul.f32 %v72, %v156
    %v159 = vld [vmem:[#allocation2] sm:$0xff]
    %v160 = vld [vmem:[#allocation2 + $0x8] sm:$0xff]
    %vm161 = vcmask 523264
    %v163 = vsel %vm161, %v157, 0
    %v166 = vsel %vm161, %v158, 0
    %168 = vmatpush.msra.mxu0 0.0
    %169 = vmatpush.msra.mxu0 0.0
    %170 = vmatpush.msra.mxu0 0.0
    %171 = vmatpush.msra.mxu0 0.0
    %172 = vmatpush.msra.mxu0 0.0
    %173 = vmatpush.msra.mxu0 0.0
    %174 = vmatpush.msra.mxu0 0.0
    %175 = vmatpush.msra.mxu0 0.0
    %176 = vmatpush.msra.mxu0 %v38
    %177 = vmatpush.msra.mxu0 %v37
    %178 = vmatpush.msra.mxu0 %v36
    %179 = vmatpush.msra.mxu0 %v35
    %180 = vmatpush.msra.mxu0 %v34
    %181 = vmatpush.msra.mxu0 %v33
    %182 = vmatpush.msra.mxu0 %v32
    %183 = vmatpush.msra.mxu0 %v31
    %184 = vmatmul.f32.gmra.mxu0 %v163
    %v185 = vpop.f32.mrf.mxu0
    %v186 = vadd.f32 0.0, %v185
    %187 = vmatmul.f32.gmra.mxu0 %v166
    %v188 = vpop.f32.mrf.mxu0
    %v189 = vadd.f32 0.0, %v188
    %190 = vdwg.mxu0
    %v191 = vadd.f32 %v159, %v186
    %v192 = vadd.f32 %v160, %v189
    %193 = vst.msk [vmem:[#allocation2] sm:$0xff] %vm23, %v191
    %194 = vst.msk [vmem:[#allocation2 + $0x8] sm:$0xff] %vm23, %v192
    %v195 = vld [vmem:[#allocation2] sm:$0xff]
    %v196 = vld [vmem:[#allocation2 + $0x8] sm:$0xff]
    %v197 = vld [vmem:[%s4] sm:$0x1]
    %v199 = vperm.slane %v197, 0
    %v201 = vadd.f32 %v195, %v199
    %v202 = vadd.f32 %v196, %v199
    %203 = vst.msk [vmem:[#allocation3] sm:$0xff] %vm23, %v201
    %204 = vst.msk [vmem:[#allocation3 + $0x8] sm:$0xff] %vm23, %v202
    // Predicated region
    $region22: #{mlp_block.1} parent=1 // pred_check
      _
    $region23: #{mlp_block.1} parent=1 // pred_check_branch
      %206 = sbr.rel (0) target = $region25
    $region24: #{mlp_block.1} parent=1 // pred_region
      %208 = vsyncadd [#allocation4], 0
      %s209 = sshll.u32 [#allocation3], 4
      %s210 = int_to_ptr.vmem [resolvable:$true] %s209
      %s211 = sshll.u32 %s5, 4
      %s212 = int_to_ptr.hbm [resolvable:$true] %s211
      %217 = dma.vmem_to_hbm [thread:$0]  %s210, 256, %s212, [#allocation4], 128, 128, 8
    $region25: #{mlp_block.1} parent=1 // pred_fallthru
      _
    // Predicated region
    $region26: #{mlp_block.1} parent=1 // pred_check
      _
    $region27: #{mlp_block.1} parent=1 // pred_check_branch
      %219 = sbr.rel (0) target = $region29
    $region28: #{mlp_block.1} parent=1 // pred_region
      %221 = dma.done [#allocation4], 256
    $region29: #{mlp_block.1} parent=1 // pred_fallthru
      _
    %222 = vsyncpa [#allocation4], 1

</llo_original>
